<compile_context>
chip_gen: v5e
topology: v5e:2x2
jax: 0.10.0
libtpu: 0.0.40
codegen_flags: <defaults>
</compile_context>

<pallas_src>
import jax
import jax.numpy as jnp
from jax import lax
from jax.experimental import pallas as pl
from jax.experimental.pallas import tpu as pltpu

INPUT_SIZE = 1   # classic sin->cos regression setup for this module
HIDDEN = 32
OUT_DIM = 1


def rnn_kernel(xp_ref, h0_ref, w_hh_ref, w_out_ref, b_out_ref,
               y_ref, h_out_ref, h_all):
    """Full-sequence tanh-RNN recurrence + batched output Linear.

    xp_ref:    (T, B, H)  precomputed x @ W_ih^T + (b_ih + b_hh), time-major
    h0_ref:    (B, H)     initial hidden state
    w_hh_ref:  (H, H)     hidden->hidden weight (transposed, used as h @ W)
    w_out_ref: (1, H)     output Linear weight row (PyTorch (out,in) layout)
    b_out_ref: (1, 1)     output Linear bias
    y_ref:     (T, B)     lane-dense per-timestep output
    h_out_ref: (B, H)     final hidden state
    h_all:     (T, B, H)  VMEM scratch with all hidden states
    """
    T = xp_ref.shape[0]
    w_hh = w_hh_ref[...]

    def step(t, h):
        # Serial critical path: one MXU matmul + one EUP tanh per timestep.
        h_new = jnp.tanh(
            xp_ref[t] + jnp.dot(h, w_hh, preferred_element_type=jnp.float32))
        h_all[t] = h_new
        return h_new

    # T is small and static -> fully unroll for LLO scheduling visibility.
    h_final = lax.fori_loop(0, T, step, h0_ref[...], unroll=True)
    h_out_ref[...] = h_final

    # Output Linear for all timesteps at once: VPU multiply + cross-lane reduce
    # (keeps the 32->1 projection off the MXU and off the serial chain).
    w_out = w_out_ref[...][None]                         # (1, 1, H)
    y_ref[...] = jnp.sum(h_all[...] * w_out, axis=-1) + b_out_ref[...]


def rnn_forward(x, h_state, params):
    """Mirrors RNN.forward(x, h_state) -> (outs, h_state)."""
    B, T, I = x.shape
    H = params["w_hh"].shape[0]

    # Hoisted off the serial chain: input projection (outer product for I=1)
    # + bias, fused with the (B,T,I)->(T,B,H) layout change in one XLA op.
    x_proj = (jnp.einsum("bti,ih->tbh", x.astype(jnp.float32), params["w_ih"])
              + params["b"])                              # (T, B, H)
    h0 = h_state[0].astype(jnp.float32)                   # (B, H)

    vmem = pl.BlockSpec(memory_space=pltpu.MemorySpace.VMEM)
    cost = pl.CostEstimate(
        flops=2 * T * B * H * H + 2 * T * B * H,
        transcendentals=T * B * H,
        bytes_accessed=4 * (T * B * H + B * H + H * H + H + 1 + T * B + B * H),
    )

    y_tb, h_final = pl.pallas_call(
        rnn_kernel,
        out_shape=(
            jax.ShapeDtypeStruct((T, B), jnp.float32),    # lane-dense y
            jax.ShapeDtypeStruct((B, H), jnp.float32),    # final hidden state
        ),
        in_specs=[vmem] * 5,
        out_specs=(vmem, vmem),
        scratch_shapes=[pltpu.VMEM((T, B, H), jnp.float32)],
        cost_estimate=cost,
    )(x_proj, h0, params["w_hh"], params["w_out_row"], params["b_out"])

    outs = jnp.transpose(y_tb)[:, :, None]                # (B, T, 1)
    h_state_out = h_final[None, :, :]                     # (1, B, H)
    return outs, h_state_out


def init_params(key, input_size=INPUT_SIZE, hidden=HIDDEN):
    """Deterministic init mimicking PyTorch's U(-1/sqrt(H), 1/sqrt(H))."""
    ks = jax.random.split(key, 6)
    bound = 1.0 / jnp.sqrt(hidden)
    u = lambda k, shape: jax.random.uniform(k, shape, jnp.float32, -bound, bound)
    w_ih = u(ks[0], (hidden, input_size)).T               # (I, H)
    w_hh = u(ks[1], (hidden, hidden)).T                   # (H, H)
    b_ih = u(ks[2], (hidden,))
    b_hh = u(ks[3], (hidden,))
    w_out = u(ks[4], (OUT_DIM, hidden))                   # (1, H) PyTorch layout
    b_out = u(ks[5], (OUT_DIM,))
    return {
        "w_ih": w_ih,
        "w_hh": w_hh,
        "b": (b_ih + b_hh)[None, :],                      # (1, H)
        "w_out_row": w_out,                               # (1, H)
        "b_out": b_out[None, :],                          # (1, 1)
    }


def rnn_reference(x, h_state, params):
    """Pure-JAX reference for correctness check."""
    h = h_state[0]
    outs = []
    for t in range(x.shape[1]):
        h = jnp.tanh(x[:, t, :] @ params["w_ih"] + h @ params["w_hh"] + params["b"])
        outs.append(h @ params["w_out_row"].T + params["b_out"])
    return jnp.stack(outs, axis=1), h[None, :, :]


if __name__ == "__main__":
    B, T = 2, 8
    key = jax.random.PRNGKey(0)
    k_x, k_h, k_p = jax.random.split(key, 3)

    x = jax.random.normal(k_x, (B, T, INPUT_SIZE), jnp.float32)
    h_state = jax.random.normal(k_h, (1, B, HIDDEN), jnp.float32)
    params = init_params(k_p)

    outs, h_out = rnn_forward(x, h_state, params)
    outs = jax.block_until_ready(outs)
    h_out = jax.block_until_ready(h_out)

    ref_outs, ref_h = rnn_reference(x, h_state, params)
    assert outs.shape == (B, T, 1) and h_out.shape == (1, B, HIDDEN)
    assert jnp.allclose(outs, ref_outs, atol=1e-5), "output mismatch"
    assert jnp.allclose(h_out, ref_h, atol=1e-5), "hidden state mismatch"

    print("KERNEL_OK")
</pallas_src>

<mosaic_0001>
module attributes {stable_mosaic.version = 11 : i64} {
  func.func @rnn_kernel(%arg0: memref<8x2x32xf32, #tpu.memory_space<vmem>>, %arg1: memref<2x32xf32, #tpu.memory_space<vmem>>, %arg2: memref<32x32xf32, #tpu.memory_space<vmem>>, %arg3: memref<1x32xf32, #tpu.memory_space<vmem>>, %arg4: memref<1x1xf32, #tpu.memory_space<vmem>>, %arg5: memref<8x2xf32, #tpu.memory_space<vmem>>, %arg6: memref<2x32xf32, #tpu.memory_space<vmem>>, %arg7: memref<8x2x32xf32, #tpu.memory_space<vmem>>) attributes {dimension_semantics = [], scalar_prefetch = 0 : i64, scratch_operands = 1 : i64, tpu.core_type = #tpu.core_type<tc>} {
    %c0 = arith.constant 0 : index
    %c0_0 = arith.constant 0 : index
    %0 = vector.load %arg2[%c0, %c0_0] : memref<32x32xf32, #tpu.memory_space<vmem>>, vector<32x32xf32>
    %c0_1 = arith.constant 0 : index
    %c0_2 = arith.constant 0 : index
    %1 = vector.load %arg1[%c0_1, %c0_2] : memref<2x32xf32, #tpu.memory_space<vmem>>, vector<2x32xf32>
    %c0_i32 = arith.constant 0 : i32
    %2 = arith.index_cast %c0_i32 : i32 to index
    %c0_3 = arith.constant 0 : index
    %c0_4 = arith.constant 0 : index
    %3 = vector.load %arg0[%2, %c0_3, %c0_4] : memref<8x2x32xf32, #tpu.memory_space<vmem>>, vector<1x2x32xf32>
    %4 = vector.shape_cast %3 : vector<1x2x32xf32> to vector<2x32xf32>
    %cst = arith.constant dense<0.000000e+00> : vector<2x32xf32>
    %5 = tpu.matmul %1, %0, %cst {dimension_numbers = #tpu.dot_dimension_numbers<[1], [0], [0], [1], [0, 0, 1, 1], [], []>} : vector<2x32xf32>, vector<32x32xf32>, vector<2x32xf32> -> vector<2x32xf32>
    %6 = arith.addf %4, %5 : vector<2x32xf32>
    %7 = math.tanh %6 : vector<2x32xf32>
    %8 = arith.index_cast %c0_i32 : i32 to index
    %c0_5 = arith.constant 0 : index
    %c0_6 = arith.constant 0 : index
    %9 = vector.load %arg7[%8, %c0_5, %c0_6] : memref<8x2x32xf32, #tpu.memory_space<vmem>>, vector<1x2x32xf32>
    %10 = vector.shape_cast %9 : vector<1x2x32xf32> to vector<2x32xf32>
    %11 = vector.shape_cast %7 : vector<2x32xf32> to vector<1x2x32xf32>
    tpu.vector_store %arg7[%8, %c0_5, %c0_6], %11 {strides = array<i32>} : memref<8x2x32xf32, #tpu.memory_space<vmem>>, vector<1x2x32xf32>,
    %c1_i32 = arith.constant 1 : i32
    %12 = arith.index_cast %c1_i32 : i32 to index
    %c0_7 = arith.constant 0 : index
    %c0_8 = arith.constant 0 : index
    %13 = vector.load %arg0[%12, %c0_7, %c0_8] : memref<8x2x32xf32, #tpu.memory_space<vmem>>, vector<1x2x32xf32>
    %14 = vector.shape_cast %13 : vector<1x2x32xf32> to vector<2x32xf32>
    %cst_9 = arith.constant dense<0.000000e+00> : vector<2x32xf32>
    %15 = tpu.matmul %7, %0, %cst_9 {dimension_numbers = #tpu.dot_dimension_numbers<[1], [0], [0], [1], [0, 0, 1, 1], [], []>} : vector<2x32xf32>, vector<32x32xf32>, vector<2x32xf32> -> vector<2x32xf32>
    %16 = arith.addf %14, %15 : vector<2x32xf32>
    %17 = math.tanh %16 : vector<2x32xf32>
    %18 = arith.index_cast %c1_i32 : i32 to index
    %c0_10 = arith.constant 0 : index
    %c0_11 = arith.constant 0 : index
    %19 = vector.load %arg7[%18, %c0_10, %c0_11] : memref<8x2x32xf32, #tpu.memory_space<vmem>>, vector<1x2x32xf32>
    %20 = vector.shape_cast %19 : vector<1x2x32xf32> to vector<2x32xf32>
    %21 = vector.shape_cast %17 : vector<2x32xf32> to vector<1x2x32xf32>
    tpu.vector_store %arg7[%18, %c0_10, %c0_11], %21 {strides = array<i32>} : memref<8x2x32xf32, #tpu.memory_space<vmem>>, vector<1x2x32xf32>,
    %c2_i32 = arith.constant 2 : i32
    %22 = arith.index_cast %c2_i32 : i32 to index
    %c0_12 = arith.constant 0 : index
    %c0_13 = arith.constant 0 : index
    %23 = vector.load %arg0[%22, %c0_12, %c0_13] : memref<8x2x32xf32, #tpu.memory_space<vmem>>, vector<1x2x32xf32>
    %24 = vector.shape_cast %23 : vector<1x2x32xf32> to vector<2x32xf32>
    %cst_14 = arith.constant dense<0.000000e+00> : vector<2x32xf32>
    %25 = tpu.matmul %17, %0, %cst_14 {dimension_numbers = #tpu.dot_dimension_numbers<[1], [0], [0], [1], [0, 0, 1, 1], [], []>} : vector<2x32xf32>, vector<32x32xf32>, vector<2x32xf32> -> vector<2x32xf32>
    %26 = arith.addf %24, %25 : vector<2x32xf32>
    %27 = math.tanh %26 : vector<2x32xf32>
    %28 = arith.index_cast %c2_i32 : i32 to index
    %c0_15 = arith.constant 0 : index
    %c0_16 = arith.constant 0 : index
    %29 = vector.load %arg7[%28, %c0_15, %c0_16] : memref<8x2x32xf32, #tpu.memory_space<vmem>>, vector<1x2x32xf32>
    %30 = vector.shape_cast %29 : vector<1x2x32xf32> to vector<2x32xf32>
    %31 = vector.shape_cast %27 : vector<2x32xf32> to vector<1x2x32xf32>
    tpu.vector_store %arg7[%28, %c0_15, %c0_16], %31 {strides = array<i32>} : memref<8x2x32xf32, #tpu.memory_space<vmem>>, vector<1x2x32xf32>,
    %c3_i32 = arith.constant 3 : i32
    %32 = arith.index_cast %c3_i32 : i32 to index
    %c0_17 = arith.constant 0 : index
    %c0_18 = arith.constant 0 : index
    %33 = vector.load %arg0[%32, %c0_17, %c0_18] : memref<8x2x32xf32, #tpu.memory_space<vmem>>, vector<1x2x32xf32>
    %34 = vector.shape_cast %33 : vector<1x2x32xf32> to vector<2x32xf32>
    %cst_19 = arith.constant dense<0.000000e+00> : vector<2x32xf32>
    %35 = tpu.matmul %27, %0, %cst_19 {dimension_numbers = #tpu.dot_dimension_numbers<[1], [0], [0], [1], [0, 0, 1, 1], [], []>} : vector<2x32xf32>, vector<32x32xf32>, vector<2x32xf32> -> vector<2x32xf32>
    %36 = arith.addf %34, %35 : vector<2x32xf32>
    %37 = math.tanh %36 : vector<2x32xf32>
    %38 = arith.index_cast %c3_i32 : i32 to index
    %c0_20 = arith.constant 0 : index
    %c0_21 = arith.constant 0 : index
    %39 = vector.load %arg7[%38, %c0_20, %c0_21] : memref<8x2x32xf32, #tpu.memory_space<vmem>>, vector<1x2x32xf32>
    %40 = vector.shape_cast %39 : vector<1x2x32xf32> to vector<2x32xf32>
    %41 = vector.shape_cast %37 : vector<2x32xf32> to vector<1x2x32xf32>
    tpu.vector_store %arg7[%38, %c0_20, %c0_21], %41 {strides = array<i32>} : memref<8x2x32xf32, #tpu.memory_space<vmem>>, vector<1x2x32xf32>,
    %c4_i32 = arith.constant 4 : i32
    %42 = arith.index_cast %c4_i32 : i32 to index
    %c0_22 = arith.constant 0 : index
    %c0_23 = arith.constant 0 : index
    %43 = vector.load %arg0[%42, %c0_22, %c0_23] : memref<8x2x32xf32, #tpu.memory_space<vmem>>, vector<1x2x32xf32>
    %44 = vector.shape_cast %43 : vector<1x2x32xf32> to vector<2x32xf32>
    %cst_24 = arith.constant dense<0.000000e+00> : vector<2x32xf32>
    %45 = tpu.matmul %37, %0, %cst_24 {dimension_numbers = #tpu.dot_dimension_numbers<[1], [0], [0], [1], [0, 0, 1, 1], [], []>} : vector<2x32xf32>, vector<32x32xf32>, vector<2x32xf32> -> vector<2x32xf32>
    %46 = arith.addf %44, %45 : vector<2x32xf32>
    %47 = math.tanh %46 : vector<2x32xf32>
    %48 = arith.index_cast %c4_i32 : i32 to index
    %c0_25 = arith.constant 0 : index
    %c0_26 = arith.constant 0 : index
    %49 = vector.load %arg7[%48, %c0_25, %c0_26] : memref<8x2x32xf32, #tpu.memory_space<vmem>>, vector<1x2x32xf32>
    %50 = vector.shape_cast %49 : vector<1x2x32xf32> to vector<2x32xf32>
    %51 = vector.shape_cast %47 : vector<2x32xf32> to vector<1x2x32xf32>
    tpu.vector_store %arg7[%48, %c0_25, %c0_26], %51 {strides = array<i32>} : memref<8x2x32xf32, #tpu.memory_space<vmem>>, vector<1x2x32xf32>,
    %c5_i32 = arith.constant 5 : i32
    %52 = arith.index_cast %c5_i32 : i32 to index
    %c0_27 = arith.constant 0 : index
    %c0_28 = arith.constant 0 : index
    %53 = vector.load %arg0[%52, %c0_27, %c0_28] : memref<8x2x32xf32, #tpu.memory_space<vmem>>, vector<1x2x32xf32>
    %54 = vector.shape_cast %53 : vector<1x2x32xf32> to vector<2x32xf32>
    %cst_29 = arith.constant dense<0.000000e+00> : vector<2x32xf32>
    %55 = tpu.matmul %47, %0, %cst_29 {dimension_numbers = #tpu.dot_dimension_numbers<[1], [0], [0], [1], [0, 0, 1, 1], [], []>} : vector<2x32xf32>, vector<32x32xf32>, vector<2x32xf32> -> vector<2x32xf32>
    %56 = arith.addf %54, %55 : vector<2x32xf32>
    %57 = math.tanh %56 : vector<2x32xf32>
    %58 = arith.index_cast %c5_i32 : i32 to index
    %c0_30 = arith.constant 0 : index
    %c0_31 = arith.constant 0 : index
    %59 = vector.load %arg7[%58, %c0_30, %c0_31] : memref<8x2x32xf32, #tpu.memory_space<vmem>>, vector<1x2x32xf32>
    %60 = vector.shape_cast %59 : vector<1x2x32xf32> to vector<2x32xf32>
    %61 = vector.shape_cast %57 : vector<2x32xf32> to vector<1x2x32xf32>
    tpu.vector_store %arg7[%58, %c0_30, %c0_31], %61 {strides = array<i32>} : memref<8x2x32xf32, #tpu.memory_space<vmem>>, vector<1x2x32xf32>,
    %c6_i32 = arith.constant 6 : i32
    %62 = arith.index_cast %c6_i32 : i32 to index
    %c0_32 = arith.constant 0 : index
    %c0_33 = arith.constant 0 : index
    %63 = vector.load %arg0[%62, %c0_32, %c0_33] : memref<8x2x32xf32, #tpu.memory_space<vmem>>, vector<1x2x32xf32>
    %64 = vector.shape_cast %63 : vector<1x2x32xf32> to vector<2x32xf32>
    %cst_34 = arith.constant dense<0.000000e+00> : vector<2x32xf32>
    %65 = tpu.matmul %57, %0, %cst_34 {dimension_numbers = #tpu.dot_dimension_numbers<[1], [0], [0], [1], [0, 0, 1, 1], [], []>} : vector<2x32xf32>, vector<32x32xf32>, vector<2x32xf32> -> vector<2x32xf32>
    %66 = arith.addf %64, %65 : vector<2x32xf32>
    %67 = math.tanh %66 : vector<2x32xf32>
    %68 = arith.index_cast %c6_i32 : i32 to index
    %c0_35 = arith.constant 0 : index
    %c0_36 = arith.constant 0 : index
    %69 = vector.load %arg7[%68, %c0_35, %c0_36] : memref<8x2x32xf32, #tpu.memory_space<vmem>>, vector<1x2x32xf32>
    %70 = vector.shape_cast %69 : vector<1x2x32xf32> to vector<2x32xf32>
    %71 = vector.shape_cast %67 : vector<2x32xf32> to vector<1x2x32xf32>
    tpu.vector_store %arg7[%68, %c0_35, %c0_36], %71 {strides = array<i32>} : memref<8x2x32xf32, #tpu.memory_space<vmem>>, vector<1x2x32xf32>,
    %c7_i32 = arith.constant 7 : i32
    %72 = arith.index_cast %c7_i32 : i32 to index
    %c0_37 = arith.constant 0 : index
    %c0_38 = arith.constant 0 : index
    %73 = vector.load %arg0[%72, %c0_37, %c0_38] : memref<8x2x32xf32, #tpu.memory_space<vmem>>, vector<1x2x32xf32>
    %74 = vector.shape_cast %73 : vector<1x2x32xf32> to vector<2x32xf32>
    %cst_39 = arith.constant dense<0.000000e+00> : vector<2x32xf32>
    %75 = tpu.matmul %67, %0, %cst_39 {dimension_numbers = #tpu.dot_dimension_numbers<[1], [0], [0], [1], [0, 0, 1, 1], [], []>} : vector<2x32xf32>, vector<32x32xf32>, vector<2x32xf32> -> vector<2x32xf32>
    %76 = arith.addf %74, %75 : vector<2x32xf32>
    %77 = math.tanh %76 : vector<2x32xf32>
    %78 = arith.index_cast %c7_i32 : i32 to index
    %c0_40 = arith.constant 0 : index
    %c0_41 = arith.constant 0 : index
    %79 = vector.load %arg7[%78, %c0_40, %c0_41] : memref<8x2x32xf32, #tpu.memory_space<vmem>>, vector<1x2x32xf32>
    %80 = vector.shape_cast %79 : vector<1x2x32xf32> to vector<2x32xf32>
    %81 = vector.shape_cast %77 : vector<2x32xf32> to vector<1x2x32xf32>
    tpu.vector_store %arg7[%78, %c0_40, %c0_41], %81 {strides = array<i32>} : memref<8x2x32xf32, #tpu.memory_space<vmem>>, vector<1x2x32xf32>,
    %c8_i32 = arith.constant 8 : i32
    %c0_42 = arith.constant 0 : index
    %c0_43 = arith.constant 0 : index
    %82 = vector.load %arg6[%c0_42, %c0_43] : memref<2x32xf32, #tpu.memory_space<vmem>>, vector<2x32xf32>
    tpu.vector_store %arg6[%c0_42, %c0_43], %77 {strides = array<i32>} : memref<2x32xf32, #tpu.memory_space<vmem>>, vector<2x32xf32>,
    %c0_44 = arith.constant 0 : index
    %c0_45 = arith.constant 0 : index
    %83 = vector.load %arg3[%c0_44, %c0_45] : memref<1x32xf32, #tpu.memory_space<vmem>>, vector<1x32xf32>
    %84 = vector.shape_cast %83 : vector<1x32xf32> to vector<1x1x32xf32>
    %c0_46 = arith.constant 0 : index
    %c0_47 = arith.constant 0 : index
    %c0_48 = arith.constant 0 : index
    %85 = vector.load %arg7[%c0_46, %c0_47, %c0_48] : memref<8x2x32xf32, #tpu.memory_space<vmem>>, vector<8x2x32xf32>
    %86 = vector.broadcast %84 : vector<1x1x32xf32> to vector<8x2x32xf32>
    %87 = arith.mulf %85, %86 : vector<8x2x32xf32>
    %cst_49 = arith.constant dense<0.000000e+00> : vector<8x2xf32>
    %88 = vector.multi_reduction <add>, %87, %cst_49 [2] : vector<8x2x32xf32> to vector<8x2xf32>
    %c0_50 = arith.constant 0 : index
    %c0_51 = arith.constant 0 : index
    %89 = vector.load %arg4[%c0_50, %c0_51] : memref<1x1xf32, #tpu.memory_space<vmem>>, vector<1x1xf32>
    %90 = vector.broadcast %89 : vector<1x1xf32> to vector<8x2xf32>
    %91 = arith.addf %88, %90 : vector<8x2xf32>
    %c0_52 = arith.constant 0 : index
    %c0_53 = arith.constant 0 : index
    %92 = vector.load %arg5[%c0_52, %c0_53] : memref<8x2xf32, #tpu.memory_space<vmem>>, vector<8x2xf32>
    tpu.vector_store %arg5[%c0_52, %c0_53], %91 {strides = array<i32>} : memref<8x2xf32, #tpu.memory_space<vmem>>, vector<8x2xf32>,
    return
  }
}

</mosaic_0001>

<llo_original>
// kernel: tpu_custom_call.1
$region0: #{tpu_custom_call.1}
  #allocation0 [shape = 'u32[]', space=smem, size = 0x4, offset = 0x4, fixed_abs, tag = 'smem constant byte address 0x4 - core index']
  #allocation1 [shape = 'u32[72,128]{1,0:T(1,128)}', space=vmem, size = 0x9000, scoped, tag = 'internal scratch']
  #allocation2 [shape = 'f32[8,2,32]{2,1,0:T(2,128)}', space=vmem, size = 0x2000, scoped, tag = 'scratch operand']
  #allocation3 [shape = 'f32[1,1]{1,0:T(1,128)S(1)}', space=vmem, size = 0x200, scoped, tag = 'scoped memory for tpu_custom_call.1']
  %s0 = inlined_call_operand.hbm [shape: f32[8,2,32], index: 0, kind: input, shape index: {}]
  %s1 = inlined_call_operand.vmem [shape: f32[2,32], index: 1, kind: input, shape index: {}]
  %s2 = inlined_call_operand.hbm [shape: f32[32,32], index: 2, kind: input, shape index: {}]
  %s3 = inlined_call_operand.vmem [shape: f32[1,32], index: 3, kind: input, shape index: {}]
  %s4 = inlined_call_operand.<no memory space> [shape: f32[1,1], index: 4, kind: input, shape index: {}]
  %s5 = inlined_call_operand.vmem [shape: f32[8,2], index: 5, kind: output, shape index: {0}]
  %s6 = inlined_call_operand.hbm [shape: f32[2,32], index: 6, kind: output, shape index: {1}]
  %7 = xla_tuple %s5, %s6
  %s8 = sld [smem:[#allocation0]]
  $region46: #{tpu_custom_call.1} parent=0
    _
  %s10 = ssub.s32 1, %s8
  %s11 = scalar_select 0, %s10, %s8
  %v12 = vstv %s4
  %13 = vst [vmem:[#allocation3] sm:$0x1] %v12
  $region1: #{tpu_custom_call.1} parent=0
    #allocation4 [shape = 'u8[8192]{0}', space=vmem, size = 0x2000, scoped, tag = 'input window, operand 0, single buffered']
    #allocation5 [shape = 's32[1]{0}', space=sflag, size = 0x4, scoped, tag = 'scoped memory for tpu_custom_call.1']
    #allocation6 [shape = 's32[1]{0}', space=sflag, size = 0x4, scoped, tag = 'scoped memory for tpu_custom_call.1']
    #allocation7 [shape = 'u8[16384]{0}', space=vmem, size = 0x4000, scoped, tag = 'input window, operand 2, single buffered']
    #allocation8 [shape = 's32[1]{0}', space=sflag, size = 0x4, scoped, tag = 'scoped memory for tpu_custom_call.1']
    #allocation9 [shape = 'u8[1024]{0}', space=vmem, size = 0x400, scoped, tag = 'output window, operand 1, single buffered']
    %14 = vsyncpa [#allocation5], 0
    %15 = vsyncpa [#allocation8], 0
    %16 = vsyncpa [#allocation6], 0
    // Predicated region
    $region2: #{tpu_custom_call.1} parent=1 // pred_check
      _
    $region3: #{tpu_custom_call.1} parent=1 // pred_check_branch
      %18 = sbr.rel (0) target = $region5
    $region4: #{tpu_custom_call.1} parent=1 // pred_region
      %20 = vsyncadd [#allocation5], 0
      %s21 = sshll.u32 %s0, 4
      %s22 = int_to_ptr.hbm [resolvable:$true] %s21
      %s23 = sshll.u32 [#allocation4], 4
      %s24 = int_to_ptr.vmem [resolvable:$true] %s23
      %29 = dma.hbm_to_vmem [thread:$0]  %s22, 256, %s24, [#allocation5], 32, 32, 2
    $region5: #{tpu_custom_call.1} parent=1 // pred_fallthru
      _
    // Predicated region
    $region6: #{tpu_custom_call.1} parent=1 // pred_check
      _
    $region7: #{tpu_custom_call.1} parent=1 // pred_check_branch
      %31 = sbr.rel (0) target = $region9
    $region8: #{tpu_custom_call.1} parent=1 // pred_region
      _
    $region9: #{tpu_custom_call.1} parent=1 // pred_fallthru
      _
    // Predicated region
    $region10: #{tpu_custom_call.1} parent=1 // pred_check
      _
    $region11: #{tpu_custom_call.1} parent=1 // pred_check_branch
      %33 = sbr.rel (0) target = $region13
    $region12: #{tpu_custom_call.1} parent=1 // pred_region
      %35 = vsyncadd [#allocation8], 0
      %s36 = sshll.u32 %s2, 4
      %s37 = int_to_ptr.hbm [resolvable:$true] %s36
      %s38 = sshll.u32 [#allocation7], 4
      %s39 = int_to_ptr.vmem [resolvable:$true] %s38
      %44 = dma.hbm_to_vmem [thread:$0]  %s37, 512, %s39, [#allocation8], 128, 128, 8
    $region13: #{tpu_custom_call.1} parent=1 // pred_fallthru
      _
    // Predicated region
    $region14: #{tpu_custom_call.1} parent=1 // pred_check
      _
    $region15: #{tpu_custom_call.1} parent=1 // pred_check_branch
      %46 = sbr.rel (0) target = $region17
    $region16: #{tpu_custom_call.1} parent=1 // pred_region
      _
    $region17: #{tpu_custom_call.1} parent=1 // pred_fallthru
      _
    // Predicated region
    $region18: #{tpu_custom_call.1} parent=1 // pred_check
      _
    $region19: #{tpu_custom_call.1} parent=1 // pred_check_branch
      %48 = sbr.rel (0) target = $region21
    $region20: #{tpu_custom_call.1} parent=1 // pred_region
      _
    $region21: #{tpu_custom_call.1} parent=1 // pred_fallthru
      _
    // Predicated region
    $region22: #{tpu_custom_call.1} parent=1 // pred_check
      _
    $region23: #{tpu_custom_call.1} parent=1 // pred_check_branch
      %50 = sbr.rel (0) target = $region25
    $region24: #{tpu_custom_call.1} parent=1 // pred_region
      %52 = dma.done [#allocation5], 256
    $region25: #{tpu_custom_call.1} parent=1 // pred_fallthru
      _
    // Predicated region
    $region26: #{tpu_custom_call.1} parent=1 // pred_check
      _
    $region27: #{tpu_custom_call.1} parent=1 // pred_check_branch
      %54 = sbr.rel (0) target = $region29
    $region28: #{tpu_custom_call.1} parent=1 // pred_region
      %56 = dma.done [#allocation8], 512
    $region29: #{tpu_custom_call.1} parent=1 // pred_fallthru
      _
    %v57 = vld [vmem:[#allocation7] sm:$0xff]
    %v58 = vld [vmem:[#allocation7 + $0x8] sm:$0xff]
    %v59 = vld [vmem:[#allocation7 + $0x10] sm:$0xff]
    %v60 = vld [vmem:[#allocation7 + $0x18] sm:$0xff]
    %v61 = vld [vmem:[%s1] sm:$0x3]
    %v62 = vld [vmem:[#allocation4] sm:$0x3]
    %vm63 = vcmask 261120
    %v65 = vsel %vm63, %v61, 0
    %67 = vmatpush.msra.mxu0 0.0
    %68 = vmatpush.msra.mxu0 0.0
    %69 = vmatpush.msra.mxu0 0.0
    %70 = vmatpush.msra.mxu0 0.0
    %71 = vmatpush.msra.mxu0 0.0
    %72 = vmatpush.msra.mxu0 0.0
    %73 = vmatpush.msra.mxu0 0.0
    %74 = vmatpush.msra.mxu0 0.0
    %75 = vmatpush.msra.mxu0 0.0
    %76 = vmatpush.msra.mxu0 0.0
    %77 = vmatpush.msra.mxu0 0.0
    %78 = vmatpush.msra.mxu0 0.0
    %79 = vmatpush.msra.mxu0 %v60
    %80 = vmatpush.msra.mxu0 %v59
    %81 = vmatpush.msra.mxu0 %v58
    %82 = vmatpush.msra.mxu0 %v57
    %83 = vmatmul.f32.gmra.mxu0 %v65
    %v84 = vpop.f32.mrf.mxu0
    %v85 = vadd.f32 0.0, %v84
    %86 = vdwg.mxu0
    %v87 = vadd.f32 %v62, %v85
    %v88 = vtanh.pop %v87
    %vm89 = vcmask 254976
    %90 = vst.msk [vmem:[#allocation2] sm:$0x3] %vm89, %v88
    %s91 = scalar_lea.vmem [#allocation4], 2
    %v92 = vld [vmem:[%s91] sm:$0x3]
    %v94 = vsel %vm63, %v88, 0
    %96 = vmatpush.msra.mxu0 0.0
    %97 = vmatpush.msra.mxu0 0.0
    %98 = vmatpush.msra.mxu0 0.0
    %99 = vmatpush.msra.mxu0 0.0
    %100 = vmatpush.msra.mxu0 0.0
    %101 = vmatpush.msra.mxu0 0.0
    %102 = vmatpush.msra.mxu0 0.0
    %103 = vmatpush.msra.mxu0 0.0
    %104 = vmatpush.msra.mxu0 0.0
    %105 = vmatpush.msra.mxu0 0.0
    %106 = vmatpush.msra.mxu0 0.0
    %107 = vmatpush.msra.mxu0 0.0
    %108 = vmatpush.msra.mxu0 %v60
    %109 = vmatpush.msra.mxu0 %v59
    %110 = vmatpush.msra.mxu0 %v58
    %111 = vmatpush.msra.mxu0 %v57
    %112 = vmatmul.f32.gmra.mxu0 %v94
    %v113 = vpop.f32.mrf.mxu0
    %v114 = vadd.f32 0.0, %v113
    %115 = vdwg.mxu0
    %v116 = vadd.f32 %v92, %v114
    %v117 = vtanh.pop %v116
    %s118 = scalar_lea.vmem [#allocation2], 2
    %119 = vst.msk [vmem:[%s118] sm:$0x3] %vm89, %v117
    %s120 = scalar_lea.vmem [#allocation4], 4
    %v121 = vld [vmem:[%s120] sm:$0x3]
    %v123 = vsel %vm63, %v117, 0
    %125 = vmatpush.msra.mxu0 0.0
    %126 = vmatpush.msra.mxu0 0.0
    %127 = vmatpush.msra.mxu0 0.0
    %128 = vmatpush.msra.mxu0 0.0
    %129 = vmatpush.msra.mxu0 0.0
    %130 = vmatpush.msra.mxu0 0.0
    %131 = vmatpush.msra.mxu0 0.0
    %132 = vmatpush.msra.mxu0 0.0
    %133 = vmatpush.msra.mxu0 0.0
    %134 = vmatpush.msra.mxu0 0.0
    %135 = vmatpush.msra.mxu0 0.0
    %136 = vmatpush.msra.mxu0 0.0
    %137 = vmatpush.msra.mxu0 %v60
    %138 = vmatpush.msra.mxu0 %v59
    %139 = vmatpush.msra.mxu0 %v58
    %140 = vmatpush.msra.mxu0 %v57
    %141 = vmatmul.f32.gmra.mxu0 %v123
    %v142 = vpop.f32.mrf.mxu0
    %v143 = vadd.f32 0.0, %v142
    %144 = vdwg.mxu0
    %v145 = vadd.f32 %v121, %v143
    %v146 = vtanh.pop %v145
    %s147 = scalar_lea.vmem [#allocation2], 4
    %148 = vst.msk [vmem:[%s147] sm:$0x3] %vm89, %v146
    %s149 = scalar_lea.vmem [#allocation4], 6
    %v150 = vld [vmem:[%s149] sm:$0x3]
    %v152 = vsel %vm63, %v146, 0
    %154 = vmatpush.msra.mxu0 0.0
    %155 = vmatpush.msra.mxu0 0.0
    %156 = vmatpush.msra.mxu0 0.0
    %157 = vmatpush.msra.mxu0 0.0
    %158 = vmatpush.msra.mxu0 0.0
    %159 = vmatpush.msra.mxu0 0.0
    %160 = vmatpush.msra.mxu0 0.0
    %161 = vmatpush.msra.mxu0 0.0
    %162 = vmatpush.msra.mxu0 0.0
    %163 = vmatpush.msra.mxu0 0.0
    %164 = vmatpush.msra.mxu0 0.0
    %165 = vmatpush.msra.mxu0 0.0
    %166 = vmatpush.msra.mxu0 %v60
    %167 = vmatpush.msra.mxu0 %v59
    %168 = vmatpush.msra.mxu0 %v58
    %169 = vmatpush.msra.mxu0 %v57
    %170 = vmatmul.f32.gmra.mxu0 %v152
    %v171 = vpop.f32.mrf.mxu0
    %v172 = vadd.f32 0.0, %v171
    %173 = vdwg.mxu0
    %v174 = vadd.f32 %v150, %v172
    %v175 = vtanh.pop %v174
    %s176 = scalar_lea.vmem [#allocation2], 6
    %177 = vst.msk [vmem:[%s176] sm:$0x3] %vm89, %v175
    %s178 = scalar_lea.vmem [#allocation4], 8
    %v179 = vld [vmem:[%s178] sm:$0x3]
    %v181 = vsel %vm63, %v175, 0
    %183 = vmatpush.msra.mxu0 0.0
    %184 = vmatpush.msra.mxu0 0.0
    %185 = vmatpush.msra.mxu0 0.0
    %186 = vmatpush.msra.mxu0 0.0
    %187 = vmatpush.msra.mxu0 0.0
    %188 = vmatpush.msra.mxu0 0.0
    %189 = vmatpush.msra.mxu0 0.0
    %190 = vmatpush.msra.mxu0 0.0
    %191 = vmatpush.msra.mxu0 0.0
    %192 = vmatpush.msra.mxu0 0.0
    %193 = vmatpush.msra.mxu0 0.0
    %194 = vmatpush.msra.mxu0 0.0
    %195 = vmatpush.msra.mxu0 %v60
    %196 = vmatpush.msra.mxu0 %v59
    %197 = vmatpush.msra.mxu0 %v58
    %198 = vmatpush.msra.mxu0 %v57
    %199 = vmatmul.f32.gmra.mxu0 %v181
    %v200 = vpop.f32.mrf.mxu0
    %v201 = vadd.f32 0.0, %v200
    %202 = vdwg.mxu0
    %v203 = vadd.f32 %v179, %v201
    %v204 = vtanh.pop %v203
    %s205 = scalar_lea.vmem [#allocation2], 8
    %206 = vst.msk [vmem:[%s205] sm:$0x3] %vm89, %v204
    %s207 = scalar_lea.vmem [#allocation4], 10
    %v208 = vld [vmem:[%s207] sm:$0x3]
    %v210 = vsel %vm63, %v204, 0
    %212 = vmatpush.msra.mxu0 0.0
    %213 = vmatpush.msra.mxu0 0.0
    %214 = vmatpush.msra.mxu0 0.0
    %215 = vmatpush.msra.mxu0 0.0
    %216 = vmatpush.msra.mxu0 0.0
    %217 = vmatpush.msra.mxu0 0.0
    %218 = vmatpush.msra.mxu0 0.0
    %219 = vmatpush.msra.mxu0 0.0
    %220 = vmatpush.msra.mxu0 0.0
    %221 = vmatpush.msra.mxu0 0.0
    %222 = vmatpush.msra.mxu0 0.0
    %223 = vmatpush.msra.mxu0 0.0
    %224 = vmatpush.msra.mxu0 %v60
    %225 = vmatpush.msra.mxu0 %v59
    %226 = vmatpush.msra.mxu0 %v58
    %227 = vmatpush.msra.mxu0 %v57
    %228 = vmatmul.f32.gmra.mxu0 %v210
    %v229 = vpop.f32.mrf.mxu0
    %v230 = vadd.f32 0.0, %v229
    %231 = vdwg.mxu0
    %v232 = vadd.f32 %v208, %v230
    %v233 = vtanh.pop %v232
    %s234 = scalar_lea.vmem [#allocation2], 10
    %235 = vst.msk [vmem:[%s234] sm:$0x3] %vm89, %v233
    %s236 = scalar_lea.vmem [#allocation4], 12
    %v237 = vld [vmem:[%s236] sm:$0x3]
    %v239 = vsel %vm63, %v233, 0
    %241 = vmatpush.msra.mxu0 0.0
    %242 = vmatpush.msra.mxu0 0.0
    %243 = vmatpush.msra.mxu0 0.0
    %244 = vmatpush.msra.mxu0 0.0
    %245 = vmatpush.msra.mxu0 0.0
    %246 = vmatpush.msra.mxu0 0.0
    %247 = vmatpush.msra.mxu0 0.0
    %248 = vmatpush.msra.mxu0 0.0
    %249 = vmatpush.msra.mxu0 0.0
    %250 = vmatpush.msra.mxu0 0.0
    %251 = vmatpush.msra.mxu0 0.0
    %252 = vmatpush.msra.mxu0 0.0
    %253 = vmatpush.msra.mxu0 %v60
    %254 = vmatpush.msra.mxu0 %v59
    %255 = vmatpush.msra.mxu0 %v58
    %256 = vmatpush.msra.mxu0 %v57
    %257 = vmatmul.f32.gmra.mxu0 %v239
    %v258 = vpop.f32.mrf.mxu0
    %v259 = vadd.f32 0.0, %v258
    %260 = vdwg.mxu0
    %v261 = vadd.f32 %v237, %v259
    %v262 = vtanh.pop %v261
    %s263 = scalar_lea.vmem [#allocation2], 12
    %264 = vst.msk [vmem:[%s263] sm:$0x3] %vm89, %v262
    %s265 = scalar_lea.vmem [#allocation4], 14
    %v266 = vld [vmem:[%s265] sm:$0x3]
    %v268 = vsel %vm63, %v262, 0
    %270 = vmatpush.msra.mxu0 0.0
    %271 = vmatpush.msra.mxu0 0.0
    %272 = vmatpush.msra.mxu0 0.0
    %273 = vmatpush.msra.mxu0 0.0
    %274 = vmatpush.msra.mxu0 0.0
    %275 = vmatpush.msra.mxu0 0.0
    %276 = vmatpush.msra.mxu0 0.0
    %277 = vmatpush.msra.mxu0 0.0
    %278 = vmatpush.msra.mxu0 0.0
    %279 = vmatpush.msra.mxu0 0.0
    %280 = vmatpush.msra.mxu0 0.0
    %281 = vmatpush.msra.mxu0 0.0
    %282 = vmatpush.msra.mxu0 %v60
    %283 = vmatpush.msra.mxu0 %v59
    %284 = vmatpush.msra.mxu0 %v58
    %285 = vmatpush.msra.mxu0 %v57
    %286 = vmatmul.f32.gmra.mxu0 %v268
    %v287 = vpop.f32.mrf.mxu0
    %v288 = vadd.f32 0.0, %v287
    %289 = vdwg.mxu0
    %v290 = vadd.f32 %v266, %v288
    %v291 = vtanh.pop %v290
    %s292 = scalar_lea.vmem [#allocation2], 14
    %293 = vst.msk [vmem:[%s292] sm:$0x3] %vm89, %v291
    %294 = vst.msk [vmem:[#allocation9] sm:$0x3] %vm89, %v291
    %v295 = vld [vmem:[%s3] sm:$0x1]
    %v296 = vld [vmem:[#allocation2] sm:$0x3]
    %v297 = vld [vmem:[#allocation2 + $0x2] sm:$0x3]
    %v298 = vld [vmem:[#allocation2 + $0x4] sm:$0x3]
    %v299 = vld [vmem:[#allocation2 + $0x6] sm:$0x3]
    %v300 = vld [vmem:[#allocation2 + $0x8] sm:$0x3]
    %v301 = vld [vmem:[#allocation2 + $0xa] sm:$0x3]
    %v302 = vld [vmem:[#allocation2 + $0xc] sm:$0x3]
    %v303 = vld [vmem:[#allocation2 + $0xe] sm:$0x3]
    %v305 = vperm.slane %v295, 0
    %v307 = vmul.f32 %v296, %v305
    %v308 = vmul.f32 %v297, %v305
    %v309 = vmul.f32 %v298, %v305
    %v310 = vmul.f32 %v299, %v305
    %v311 = vmul.f32 %v300, %v305
    %v312 = vmul.f32 %v301, %v305
    %v313 = vmul.f32 %v302, %v305
    %v314 = vmul.f32 %v303, %v305
    %v315 = vsel %vm89, %v307, 0.0
    %316 = vadd.xlane.f32.xlu0 %v315
    %v317 = vpop.xlane.xlu0 %316
    %v318 = vsel %vm89, %v308, 0.0
    %319 = vadd.xlane.f32.xlu0 %v318
    %v320 = vpop.xlane.xlu0 %319
    %v321 = vsel %vm89, %v309, 0.0
    %322 = vadd.xlane.f32.xlu0 %v321
    %v323 = vpop.xlane.xlu0 %322
    %v324 = vsel %vm89, %v310, 0.0
    %325 = vadd.xlane.f32.xlu0 %v324
    %v326 = vpop.xlane.xlu0 %325
    %v327 = vsel %vm89, %v311, 0.0
    %328 = vadd.xlane.f32.xlu0 %v327
    %v329 = vpop.xlane.xlu0 %328
    %v330 = vsel %vm89, %v312, 0.0
    %331 = vadd.xlane.f32.xlu0 %v330
    %v332 = vpop.xlane.xlu0 %331
    %v333 = vsel %vm89, %v313, 0.0
    %334 = vadd.xlane.f32.xlu0 %v333
    %v335 = vpop.xlane.xlu0 %334
    %v336 = vsel %vm89, %v314, 0.0
    %337 = vadd.xlane.f32.xlu0 %v336
    %v338 = vpop.xlane.xlu0 %337
    %v339 = vld [vmem:[#allocation3] sm:$0x1]
    %v341 = vperm.slane %v339, 0
    %342 = vset.pattern.permute.xlu0 0
    %343 = vperm.xlu0 %342, %v341
    %v344 = vpop.permute.xlu0 %343
    %v346 = vadd.f32 %v317, %v344
    %v347 = vadd.f32 %v320, %v344
    %v348 = vadd.f32 %v323, %v344
    %v349 = vadd.f32 %v326, %v344
    %v350 = vadd.f32 %v329, %v344
    %v351 = vadd.f32 %v332, %v344
    %v352 = vadd.f32 %v335, %v344
    %v353 = vadd.f32 %v338, %v344
    %v362 = vlaneseq
    %v363 = vand.u32 %v362, 127
    %v364 = vperm.slane %v346, %v363
    %v365 = vperm.slane %v347, %v363
    %v366 = vperm.slane %v348, %v363
    %v367 = vperm.slane %v349, %v363
    %v368 = vperm.slane %v350, %v363
    %v369 = vperm.slane %v351, %v363
    %v370 = vperm.slane %v352, %v363
    %v371 = vperm.slane %v353, %v363
    %vm372 = vcmask 1041409
    %v373 = vsel %vm372, %v365, %v364
    %vm374 = vcmask 1042434
    %v375 = vsel %vm374, %v366, %v373
    %vm376 = vcmask 1043459
    %v377 = vsel %vm376, %v367, %v375
    %vm378 = vcmask 1044484
    %v379 = vsel %vm378, %v368, %v377
    %vm380 = vcmask 1045509
    %v381 = vsel %vm380, %v369, %v379
    %vm382 = vcmask 1046534
    %v383 = vsel %vm382, %v370, %v381
    %vm384 = vcmask 1047559
    %v385 = vsel %vm384, %v371, %v383
    %vm387 = vcmask 15360
    %388 = vst.msk [vmem:[%s5] sm:$0xff] %vm387, %v385
    // Predicated region
    $region30: #{tpu_custom_call.1} parent=1 // pred_check
      _
    $region31: #{tpu_custom_call.1} parent=1 // pred_check_branch
      %390 = sbr.rel (0) target = $region33
    $region32: #{tpu_custom_call.1} parent=1 // pred_region
      _
    $region33: #{tpu_custom_call.1} parent=1 // pred_fallthru
      _
    // Predicated region
    $region34: #{tpu_custom_call.1} parent=1 // pred_check
      _
    $region35: #{tpu_custom_call.1} parent=1 // pred_check_branch
      %392 = sbr.rel (0) target = $region37
    $region36: #{tpu_custom_call.1} parent=1 // pred_region
      %394 = vsyncadd [#allocation6], 0
      %s396 = sshll.u32 [#allocation9], 4
      %s397 = int_to_ptr.vmem [resolvable:$true] %s396
      %s398 = sshll.u32 %s6, 4
      %s399 = int_to_ptr.hbm [resolvable:$true] %s398
      %401 = dma.vmem_to_hbm [thread:$0]  %s397, 32, %s399, [#allocation6]
    $region37: #{tpu_custom_call.1} parent=1 // pred_fallthru
      _
    // Predicated region
    $region38: #{tpu_custom_call.1} parent=1 // pred_check
      _
    $region39: #{tpu_custom_call.1} parent=1 // pred_check_branch
      %403 = sbr.rel (0) target = $region41
    $region40: #{tpu_custom_call.1} parent=1 // pred_region
      _
    $region41: #{tpu_custom_call.1} parent=1 // pred_fallthru
      _
    // Predicated region
    $region42: #{tpu_custom_call.1} parent=1 // pred_check
      _
    $region43: #{tpu_custom_call.1} parent=1 // pred_check_branch
      %405 = sbr.rel (0) target = $region45
    $region44: #{tpu_custom_call.1} parent=1 // pred_region
      %407 = dma.done [#allocation6], 32
    $region45: #{tpu_custom_call.1} parent=1 // pred_fallthru
      _
    %408 = vsyncpa [#allocation5], 1
    %409 = vsyncpa [#allocation8], 1
    %410 = vsyncpa [#allocation6], 1

</llo_original>
